<compile_context>
chip_gen: v7x
topology: tpu7x:2x2x1
jax: 0.10.0
libtpu: 0.0.40
codegen_flags: <defaults>
</compile_context>

<pallas_src>
import jax
import jax.numpy as jnp
from jax.experimental import pallas as pl
from jax.experimental.pallas import tpu as pltpu

KSIZE = 8                           # kernel_size == stride of Downsample_x8
_VMEM_BUDGET = 40 * 1024 * 1024     # tile-sizing budget (conservative: fits v7x's 64 MiB)
_VMEM_LIMIT = 56 * 1024 * 1024      # scoped VMEM limit handed to Mosaic
_TM_CAP = 2048                      # max rows per M tile


def _round_up(x, m):
    return (x + m - 1) // m * m


def _floor_tile(t):
    """Round an M-tile row count down to an MXU/layout-friendly value (>= 8)."""
    if t >= 128:
        return t // 128 * 128
    return max(t // 8 * 8, 8)


# --------------------------------------------------------------------------------------
# Kernels
# --------------------------------------------------------------------------------------

def _fused_kernel(a_ref, w_ref, shift_ref, o_ref):
    """Whole-K patch matmul + BN shift + ReLU.  Grid = (M tiles,).

    One A tile is DMA'd per grid step (A streamed from HBM exactly once); the folded
    weight and shift blocks are grid-invariant and stay resident in VMEM.  The MXU
    accumulates the full K internally, so there is no fp32 VMEM accumulator and no
    init/finalize phase.
    """
    acc = jnp.dot(a_ref[...], w_ref[...], preferred_element_type=jnp.float32)
    o_ref[...] = jnp.maximum(acc + shift_ref[...], 0.0).astype(o_ref.dtype)


def _fused_kernel_kred(a_ref, w_ref, shift_ref, o_ref, acc_ref):
    """Fallback for very large K = Cin*64: reduction over the innermost grid axis."""
    k = pl.program_id(1)

    @pl.when(k == 0)
    def _init():
        acc_ref[...] = jnp.zeros_like(acc_ref)

    acc_ref[...] += jnp.dot(a_ref[...], w_ref[...], preferred_element_type=jnp.float32)

    @pl.when(k == pl.num_programs(1) - 1)
    def _finalize():
        o_ref[...] = jnp.maximum(acc_ref[...] + shift_ref[...], 0.0).astype(o_ref.dtype)


# --------------------------------------------------------------------------------------
# Wrapper
# --------------------------------------------------------------------------------------

def downsample_x8(x, conv_w, bn_gamma, bn_beta, bn_mean, bn_var, eps=1e-5):
    """x: (N, Cin, H, W) f32.  conv_w: (Cout, Cin, 8, 8).  Returns (N, Cout, H//8, W//8) f32."""
    N, Cin, H, W = x.shape
    Cout = conv_w.shape[0]
    assert H % KSIZE == 0 and W % KSIZE == 0, "spatial dims must be divisible by 8"
    Ho, Wo = H // KSIZE, W // KSIZE
    M = N * Ho * Wo                     # output rows  (n, ho, wo)
    K = Cin * KSIZE * KSIZE             # reduction    (cin, kh, kw)
    N_pad = _round_up(Cout, 128)        # lane-dense output columns
    M_ceil8 = _round_up(M, 8)

    # --- glue: fold eval-mode BN into the conv weights:  y = relu(A @ (W*scale) + shift)
    scale = (bn_gamma / jnp.sqrt(bn_var + eps)).astype(jnp.float32)          # (Cout,)
    shift = (bn_beta - bn_mean * scale).astype(jnp.float32)                  # (Cout,)
    w_mat = conv_w.reshape(Cout, K).T.astype(jnp.float32) * scale[None, :]   # (K, Cout) f32
    shift_mat = jnp.pad(shift.reshape(1, Cout), ((0, 0), (0, N_pad - Cout)))

    # --- glue: non-overlapping 8x8 patches -> (M, K) bf16, column order (cin, kh, kw) to
    # match the OIHW weight layout.  Single fused XLA pass (bf16 cast + transpose), and
    # NOT zero-padded: the kernel reads the full K per block, and the M tail relies on
    # Pallas' partial-last-block handling (tail rows are discarded by the final slice).
    # TODO(synk): fusing this rearrangement into the kernel (per-tile strided transpose of
    # NCHW x inside VMEM) would remove this HBM round trip, but it is not cleanly
    # expressible with BlockSpec, so it stays as XLA glue.
    a_mat = (x.astype(jnp.bfloat16)
             .reshape(N, Cin, Ho, KSIZE, Wo, KSIZE)
             .transpose(0, 2, 4, 1, 3, 5)
             .reshape(M, K))

    cost = pl.CostEstimate(
        flops=2 * M * K * Cout,
        transcendentals=0,
        bytes_accessed=M * K * 2 + K * Cout * 2 + M * Cout * 4,
    )

    # Conservative per-M-tile VMEM model (everything double-buffered):
    #   A: 2*TM*K*2B   W: 2*K*N_pad*2B   out: 2*TM*N_pad*4B   (+ acc TM*N_pad*4B fallback)
    w_fixed = 4 * K * N_pad
    tm_full = (_VMEM_BUDGET - w_fixed) // (4 * K + 8 * N_pad) if _VMEM_BUDGET > w_fixed else 0
    tm_need = min(128, M_ceil8)

    if tm_full >= tm_need:
        # ---------------- primary path: single K block, single Cout block ----------------
        TM = _floor_tile(min(_TM_CAP, tm_full, M_ceil8))
        w_b = jnp.pad(w_mat.astype(jnp.bfloat16), ((0, 0), (0, N_pad - Cout)))

        out_mat = pl.pallas_call(
            _fused_kernel,
            out_shape=jax.ShapeDtypeStruct((M, N_pad), jnp.float32),
            grid_spec=pltpu.PrefetchScalarGridSpec(
                num_scalar_prefetch=0,
                grid=(pl.cdiv(M, TM),),
                in_specs=[
                    pl.BlockSpec((TM, K), lambda i: (i, 0)),      # A: streamed exactly once
                    pl.BlockSpec((K, N_pad), lambda i: (0, 0)),   # folded W: grid-invariant
                    pl.BlockSpec((1, N_pad), lambda i: (0, 0)),   # BN shift row
                ],
                out_specs=pl.BlockSpec((TM, N_pad), lambda i: (i, 0)),
            ),
            compiler_params=pltpu.CompilerParams(
                dimension_semantics=("parallel",),
                vmem_limit_bytes=_VMEM_LIMIT,
            ),
            cost_estimate=cost,
        )(a_mat, w_b, shift_mat)
    else:
        # ---------------- fallback: K too large for one block -> K-reduction axis --------
        def _tm_for(tk):
            rem = _VMEM_BUDGET - 4 * tk * N_pad
            return rem // (4 * tk + 12 * N_pad) if rem > 0 else 0

        cands = range(4096, 127, -128)
        # Prefer a TK (multiple of 128) that divides K exactly, so A needs no zero padding.
        div_cands = [c for c in cands if K % c == 0 and _tm_for(c) >= 8]
        if div_cands:
            TK, K_pad = div_cands[0], K
        else:
            fit_cands = [c for c in cands if _tm_for(c) >= 8]
            if not fit_cands:
                raise ValueError("Cout too large: no (TM, TK) tiling fits the VMEM budget")
            TK = fit_cands[0]
            K_pad = _round_up(K, TK)

        if K_pad != K:
            # K-tail zero padding is required for correctness here: garbage in the K tail
            # would corrupt valid rows (zero-padded W does not protect against NaN * 0).
            a_mat = jnp.pad(a_mat, ((0, 0), (0, K_pad - K)))
            w_mat = jnp.pad(w_mat, ((0, K_pad - K), (0, 0)))
        w_b = jnp.pad(w_mat.astype(jnp.bfloat16), ((0, 0), (0, N_pad - Cout)))

        TM = _floor_tile(min(_TM_CAP, _tm_for(TK), M_ceil8))

        out_mat = pl.pallas_call(
            _fused_kernel_kred,
            out_shape=jax.ShapeDtypeStruct((M, N_pad), jnp.float32),
            grid_spec=pltpu.PrefetchScalarGridSpec(
                num_scalar_prefetch=0,
                grid=(pl.cdiv(M, TM), K_pad // TK),
                in_specs=[
                    pl.BlockSpec((TM, TK), lambda i, k: (i, k)),
                    pl.BlockSpec((TK, N_pad), lambda i, k: (k, 0)),
                    pl.BlockSpec((1, N_pad), lambda i, k: (0, 0)),
                ],
                out_specs=pl.BlockSpec((TM, N_pad), lambda i, k: (i, 0)),
                scratch_shapes=[pltpu.VMEM((TM, N_pad), jnp.float32)],
            ),
            compiler_params=pltpu.CompilerParams(
                dimension_semantics=("parallel", "arbitrary"),
                vmem_limit_bytes=_VMEM_LIMIT,
            ),
            cost_estimate=cost,
        )(a_mat, w_b, shift_mat)

    # --- glue: drop Cout padding, back to NCHW (output is 64x smaller than the input).
    return out_mat[:, :Cout].reshape(N, Ho, Wo, Cout).transpose(0, 3, 1, 2)


# --------------------------------------------------------------------------------------
# Reference + test
# --------------------------------------------------------------------------------------

def _reference(x, conv_w, bn_gamma, bn_beta, bn_mean, bn_var, eps=1e-5):
    """Pure-JAX fp32 reference of the PyTorch forward (eval-mode BN)."""
    y = jax.lax.conv_general_dilated(
        x, conv_w, window_strides=(KSIZE, KSIZE), padding="VALID",
        dimension_numbers=("NCHW", "OIHW", "NCHW"))
    scale = bn_gamma / jnp.sqrt(bn_var + eps)
    shift = bn_beta - bn_mean * scale
    y = y * scale[None, :, None, None] + shift[None, :, None, None]
    return jnp.maximum(y, 0.0)


if __name__ == "__main__":
    key = jax.random.PRNGKey(0)
    k_x, k_w, k_g, k_b, k_m, k_v = jax.random.split(key, 6)

    # Small shapes consistent with the module: batch=2, Cin=4, spatial=16 -> out spatial 2.
    N, Cin, H, W = 2, 4, 16, 16
    Cout = 8

    x = jax.random.normal(k_x, (N, Cin, H, W), dtype=jnp.float32)

    # Deterministic synthetic parameters (shapes dictated by __init__).
    conv_w = jax.random.normal(k_w, (Cout, Cin, KSIZE, KSIZE), dtype=jnp.float32) * 0.05
    bn_gamma = 1.0 + 0.1 * jax.random.normal(k_g, (Cout,), dtype=jnp.float32)
    bn_beta = 0.05 * jax.random.normal(k_b, (Cout,), dtype=jnp.float32)
    bn_mean = 0.02 * jax.random.normal(k_m, (Cout,), dtype=jnp.float32)
    bn_var = jnp.abs(jax.random.normal(k_v, (Cout,), dtype=jnp.float32)) + 0.5

    out = downsample_x8(x, conv_w, bn_gamma, bn_beta, bn_mean, bn_var)
    out = jax.block_until_ready(out)

    ref = _reference(x, conv_w, bn_gamma, bn_beta, bn_mean, bn_var)
    assert out.shape == (N, Cout, H // KSIZE, W // KSIZE), out.shape
    # bf16 matmul operands (fp32 accumulation) -> loosened tolerance vs the fp32 reference.
    assert jnp.allclose(out, ref, atol=5e-2, rtol=5e-2), float(jnp.max(jnp.abs(out - ref)))

    print("KERNEL_OK")
</pallas_src>

<mosaic_0001>
module attributes {stable_mosaic.version = 11 : i64} {
  func.func @_fused_kernel(%arg0: i32, %arg1: memref<8x256xbf16, #tpu.memory_space<vmem>>, %arg2: memref<256x128xbf16, #tpu.memory_space<vmem>>, %arg3: memref<1x128xf32, #tpu.memory_space<vmem>>, %arg4: memref<8x128xf32, #tpu.memory_space<vmem>>) attributes {dimension_semantics = [#tpu.dimension_semantics<parallel>], iteration_bounds = array<i64: 1>, scalar_prefetch = 0 : i64, scratch_operands = 0 : i64, tpu.core_type = #tpu.core_type<tc>, window_params = [{transform_indices = @transform_0, window_bounds = array<i64: 8, 256>}, {pipeline_mode = #tpu.pipeline_mode<synchronous>, transform_indices = @transform_1, window_bounds = array<i64: 256, 128>}, {pipeline_mode = #tpu.pipeline_mode<synchronous>, transform_indices = @transform_2, window_bounds = array<i64: 1, 128>}, {transform_indices = @transform_3, window_bounds = array<i64: 8, 128>}]} {
    %c0 = arith.constant 0 : index
    %c0_0 = arith.constant 0 : index
    %0 = vector.load %arg1[%c0, %c0_0] : memref<8x256xbf16, #tpu.memory_space<vmem>>, vector<8x256xbf16>
    %c0_1 = arith.constant 0 : index
    %c0_2 = arith.constant 0 : index
    %1 = vector.load %arg2[%c0_1, %c0_2] : memref<256x128xbf16, #tpu.memory_space<vmem>>, vector<256x128xbf16>
    %cst = arith.constant dense<0.000000e+00> : vector<8x128xf32>
    %2 = tpu.matmul %0, %1, %cst {dimension_numbers = #tpu.dot_dimension_numbers<[1], [0], [0], [1], [0, 0, 1, 1], [], []>} : vector<8x256xbf16>, vector<256x128xbf16>, vector<8x128xf32> -> vector<8x128xf32>
    %c0_3 = arith.constant 0 : index
    %c0_4 = arith.constant 0 : index
    %3 = vector.load %arg3[%c0_3, %c0_4] : memref<1x128xf32, #tpu.memory_space<vmem>>, vector<1x128xf32>
    %4 = vector.broadcast %3 : vector<1x128xf32> to vector<8x128xf32>
    %5 = arith.addf %2, %4 : vector<8x128xf32>
    %cst_5 = arith.constant 0.000000e+00 : f32
    %6 = vector.broadcast %cst_5 : f32 to vector<8x128xf32>
    %7 = arith.maximumf %5, %6 : vector<8x128xf32>
    %c0_6 = arith.constant 0 : index
    %c0_7 = arith.constant 0 : index
    %8 = vector.load %arg4[%c0_6, %c0_7] : memref<8x128xf32, #tpu.memory_space<vmem>>, vector<8x128xf32>
    tpu.vector_store %arg4[%c0_6, %c0_7], %7 {strides = array<i32>} : memref<8x128xf32, #tpu.memory_space<vmem>>, vector<8x128xf32>,
    return
  }
  func.func @transform_0(%arg0: i32) -> (i32, i32) {
    %c0_i32 = arith.constant 0 : i32
    %c0_i32_0 = arith.constant 0 : i32
    return %arg0, %c0_i32 : i32, i32
  }
  func.func @transform_1(%arg0: i32) -> (i32, i32) {
    %c0_i32 = arith.constant 0 : i32
    %c0_i32_0 = arith.constant 0 : i32
    %c0_i32_1 = arith.constant 0 : i32
    return %c0_i32, %c0_i32_0 : i32, i32
  }
  func.func @transform_2(%arg0: i32) -> (i32, i32) {
    %c0_i32 = arith.constant 0 : i32
    %c0_i32_0 = arith.constant 0 : i32
    %c0_i32_1 = arith.constant 0 : i32
    return %c0_i32, %c0_i32_0 : i32, i32
  }
  func.func @transform_3(%arg0: i32) -> (i32, i32) {
    %c0_i32 = arith.constant 0 : i32
    %c0_i32_0 = arith.constant 0 : i32
    return %arg0, %c0_i32 : i32, i32
  }
}

</mosaic_0001>

<llo_original>
// kernel: tpu_custom_call.1
$region0: #{tpu_custom_call.1}
  #allocation0 [shape = 'u32[]', space=smem, size = 0x4, offset = 0x4, fixed_abs, tag = 'smem constant byte address 0x4 - core index']
  #allocation1 [shape = 'u32[144,128]{1,0:T(1,128)}', space=vmem, size = 0x12000, scoped, tag = 'internal scratch']
  %s0 = inlined_call_operand.hbm [shape: bf16[8,256], index: 0, kind: input, shape index: {}]
  %s1 = inlined_call_operand.hbm [shape: bf16[256,128], index: 1, kind: input, shape index: {}]
  %s2 = inlined_call_operand.vmem [shape: f32[1,128], index: 2, kind: input, shape index: {}]
  %s3 = inlined_call_operand.hbm [shape: f32[8,128], index: 3, kind: output, shape index: {}]
  %s4 = sld [smem:[#allocation0]]
  $region30: #{tpu_custom_call.1} parent=0
    _
  %s6 = ssub.s32 1, %s4
  %s7 = scalar_select 0, %s6, %s4
  $region1: #{tpu_custom_call.1} parent=0
    #allocation2 [shape = 'u8[4096]{0}', space=vmem, size = 0x1000, scoped, tag = 'input window, operand 0, single buffered']
    #allocation3 [shape = 's32[1]{0}', space=sflag, size = 0x4, scoped, tag = 'scoped memory for tpu_custom_call.1']
    #allocation4 [shape = 's32[1]{0}', space=sflag, size = 0x4, scoped, tag = 'scoped memory for tpu_custom_call.1']
    #allocation5 [shape = 'u8[65536]{0}', space=vmem, size = 0x10000, scoped, tag = 'input window, operand 1, single buffered']
    #allocation6 [shape = 's32[1]{0}', space=sflag, size = 0x4, scoped, tag = 'scoped memory for tpu_custom_call.1']
    #allocation7 [shape = 'u8[4096]{0}', space=vmem, size = 0x1000, scoped, tag = 'output window, operand 0, single buffered']
    %8 = vsyncpa [#allocation3], 0
    %9 = vsyncpa [#allocation6], 0
    %10 = vsyncpa [#allocation4], 0
    // Predicated region
    $region2: #{tpu_custom_call.1} parent=1 // pred_check
      _
    $region3: #{tpu_custom_call.1} parent=1 // pred_check_branch
      %12 = sbr.rel (0) target = $region5
    $region4: #{tpu_custom_call.1} parent=1 // pred_region
      %s14 = ssub.s32 128, 128
      %15 = vsyncadd [#allocation3], %s14
      %s17 = sshll.u32 [#allocation2], 4
      %s18 = int_to_ptr.vmem [resolvable:$true] %s17
      %20 = dma.hbm_to_vmem [thread:$0]  %s0, 128, %s18, [#allocation3]
    $region5: #{tpu_custom_call.1} parent=1 // pred_fallthru
      _
    // Predicated region
    $region6: #{tpu_custom_call.1} parent=1 // pred_check
      _
    $region7: #{tpu_custom_call.1} parent=1 // pred_check_branch
      %22 = sbr.rel (0) target = $region9
    $region8: #{tpu_custom_call.1} parent=1 // pred_region
      %s24 = ssub.s32 2048, 2048
      %25 = vsyncadd [#allocation6], %s24
      %s26 = sshll.u32 [#allocation5], 4
      %s27 = int_to_ptr.vmem [resolvable:$true] %s26
      %32 = dma.hbm_to_vmem [thread:$0]  %s1, 2048, %s27, [#allocation6], 64, 64, 4
    $region9: #{tpu_custom_call.1} parent=1 // pred_fallthru
      _
    // Predicated region
    $region10: #{tpu_custom_call.1} parent=1 // pred_check
      _
    $region11: #{tpu_custom_call.1} parent=1 // pred_check_branch
      %34 = sbr.rel (0) target = $region13
    $region12: #{tpu_custom_call.1} parent=1 // pred_region
      _
    $region13: #{tpu_custom_call.1} parent=1 // pred_fallthru
      _
    // Predicated region
    $region14: #{tpu_custom_call.1} parent=1 // pred_check
      _
    $region15: #{tpu_custom_call.1} parent=1 // pred_check_branch
      %36 = sbr.rel (0) target = $region17
    $region16: #{tpu_custom_call.1} parent=1 // pred_region
      %37 = dma.done [#allocation3], 128
    $region17: #{tpu_custom_call.1} parent=1 // pred_fallthru
      _
    // Predicated region
    $region18: #{tpu_custom_call.1} parent=1 // pred_check
      _
    $region19: #{tpu_custom_call.1} parent=1 // pred_check_branch
      %39 = sbr.rel (0) target = $region21
    $region20: #{tpu_custom_call.1} parent=1 // pred_region
      %40 = dma.done [#allocation6], 2048
    $region21: #{tpu_custom_call.1} parent=1 // pred_fallthru
      _
    %v42 = vld [vmem:[#allocation2] sm:$0xff]
    %v43 = vld [vmem:[#allocation5] sm:$0xf]
    %v44 = vld [vmem:[#allocation5 + $0x4] sm:$0xf]
    %v45 = vld [vmem:[#allocation5 + $0x8] sm:$0xf]
    %v46 = vld [vmem:[#allocation5 + $0xc] sm:$0xf]
    %v47 = vld [vmem:[#allocation5 + $0x10] sm:$0xf]
    %v48 = vld [vmem:[#allocation5 + $0x14] sm:$0xf]
    %v49 = vld [vmem:[#allocation5 + $0x18] sm:$0xf]
    %v50 = vld [vmem:[#allocation5 + $0x1c] sm:$0xf]
    %v51 = vld [vmem:[#allocation5 + $0x20] sm:$0xf]
    %v52 = vld [vmem:[#allocation5 + $0x24] sm:$0xf]
    %v53 = vld [vmem:[#allocation5 + $0x28] sm:$0xf]
    %v54 = vld [vmem:[#allocation5 + $0x2c] sm:$0xf]
    %v55 = vld [vmem:[#allocation5 + $0x30] sm:$0xf]
    %v56 = vld [vmem:[#allocation5 + $0x34] sm:$0xf]
    %v57 = vld [vmem:[#allocation5 + $0x38] sm:$0xf]
    %v58 = vld [vmem:[#allocation5 + $0x3c] sm:$0xf]
    %v59 = vld [vmem:[#allocation5 + $0x40] sm:$0xf]
    %v60 = vld [vmem:[#allocation5 + $0x44] sm:$0xf]
    %v61 = vld [vmem:[#allocation5 + $0x48] sm:$0xf]
    %v62 = vld [vmem:[#allocation5 + $0x4c] sm:$0xf]
    %v63 = vld [vmem:[#allocation5 + $0x50] sm:$0xf]
    %v64 = vld [vmem:[#allocation5 + $0x54] sm:$0xf]
    %v65 = vld [vmem:[#allocation5 + $0x58] sm:$0xf]
    %v66 = vld [vmem:[#allocation5 + $0x5c] sm:$0xf]
    %v67 = vld [vmem:[#allocation5 + $0x60] sm:$0xf]
    %v68 = vld [vmem:[#allocation5 + $0x64] sm:$0xf]
    %v69 = vld [vmem:[#allocation5 + $0x68] sm:$0xf]
    %v70 = vld [vmem:[#allocation5 + $0x6c] sm:$0xf]
    %v71 = vld [vmem:[#allocation5 + $0x70] sm:$0xf]
    %v72 = vld [vmem:[#allocation5 + $0x74] sm:$0xf]
    %v73 = vld [vmem:[#allocation5 + $0x78] sm:$0xf]
    %v74 = vld [vmem:[#allocation5 + $0x7c] sm:$0xf]
    %v75 = vld [vmem:[%s2] sm:$0x1]
    %v77 = vlaneseq
    %v78 = vshrl.u32 %v77, 7
    %v79 = vsub.s32 0, %v78
    %v80 = vrot.slane %v75, %v79
    %v83 = vunpack.c.l.b16 %v42
    %v84 = vunpack.c.h.b16 %v42
    %v85 = vpack.c.b16 %v83, %v83
    %v86 = vpack.c.b16 %v84, %v84
    %v121 = vunpack.c.l.b16 %v43
    %v122 = vunpack.c.l.b16 %v44
    %v123 = vunpack.c.l.b16 %v45
    %v124 = vunpack.c.l.b16 %v46
    %v125 = vunpack.c.l.b16 %v47
    %v126 = vunpack.c.l.b16 %v48
    %v127 = vunpack.c.l.b16 %v49
    %v128 = vunpack.c.l.b16 %v50
    %v129 = vunpack.c.l.b16 %v51
    %v130 = vunpack.c.l.b16 %v52
    %v131 = vunpack.c.l.b16 %v53
    %v132 = vunpack.c.l.b16 %v54
    %v133 = vunpack.c.l.b16 %v55
    %v134 = vunpack.c.l.b16 %v56
    %v135 = vunpack.c.l.b16 %v57
    %v136 = vunpack.c.l.b16 %v58
    %v137 = vunpack.c.l.b16 %v59
    %v138 = vunpack.c.l.b16 %v60
    %v139 = vunpack.c.l.b16 %v61
    %v140 = vunpack.c.l.b16 %v62
    %v141 = vunpack.c.l.b16 %v63
    %v142 = vunpack.c.l.b16 %v64
    %v143 = vunpack.c.l.b16 %v65
    %v144 = vunpack.c.l.b16 %v66
    %v145 = vunpack.c.l.b16 %v67
    %v146 = vunpack.c.l.b16 %v68
    %v147 = vunpack.c.l.b16 %v69
    %v148 = vunpack.c.l.b16 %v70
    %v149 = vunpack.c.l.b16 %v71
    %v150 = vunpack.c.l.b16 %v72
    %v151 = vunpack.c.l.b16 %v73
    %v152 = vunpack.c.l.b16 %v74
    %v153 = vpack.c.b16 %v122, %v121
    %v154 = vpack.c.b16 %v124, %v123
    %v155 = vpack.c.b16 %v126, %v125
    %v156 = vpack.c.b16 %v128, %v127
    %v157 = vpack.c.b16 %v130, %v129
    %v158 = vpack.c.b16 %v132, %v131
    %v159 = vpack.c.b16 %v134, %v133
    %v160 = vpack.c.b16 %v136, %v135
    %v161 = vpack.c.b16 %v138, %v137
    %v162 = vpack.c.b16 %v140, %v139
    %v163 = vpack.c.b16 %v142, %v141
    %v164 = vpack.c.b16 %v144, %v143
    %v165 = vpack.c.b16 %v146, %v145
    %v166 = vpack.c.b16 %v148, %v147
    %v167 = vpack.c.b16 %v150, %v149
    %v168 = vpack.c.b16 %v152, %v151
    %185 = vmatprep.subr.bf16.mxu0 0
    %186 = vmatpush1.bf16.msra.mxu0 %v153
    %187 = vmatprep.subr.bf16.mxu0 0
    %188 = vmatpush1.bf16.msra.mxu0 %v154
    %189 = vmatprep.subr.bf16.mxu0 0
    %190 = vmatpush1.bf16.msra.mxu0 %v155
    %191 = vmatprep.subr.bf16.mxu0 0
    %192 = vmatpush1.bf16.msra.mxu0 %v156
    %193 = vmatprep.subr.bf16.mxu0 0
    %194 = vmatpush1.bf16.msra.mxu0 %v157
    %195 = vmatprep.subr.bf16.mxu0 0
    %196 = vmatpush1.bf16.msra.mxu0 %v158
    %197 = vmatprep.subr.bf16.mxu0 0
    %198 = vmatpush1.bf16.msra.mxu0 %v159
    %199 = vmatprep.subr.bf16.mxu0 0
    %200 = vmatpush1.bf16.msra.mxu0 %v160
    %201 = vmatprep.subr.bf16.mxu0 0
    %202 = vmatpush1.bf16.msra.mxu0 %v161
    %203 = vmatprep.subr.bf16.mxu0 0
    %204 = vmatpush1.bf16.msra.mxu0 %v162
    %205 = vmatprep.subr.bf16.mxu0 0
    %206 = vmatpush1.bf16.msra.mxu0 %v163
    %207 = vmatprep.subr.bf16.mxu0 0
    %208 = vmatpush1.bf16.msra.mxu0 %v164
    %209 = vmatprep.subr.bf16.mxu0 0
    %210 = vmatpush1.bf16.msra.mxu0 %v165
    %211 = vmatprep.subr.bf16.mxu0 0
    %212 = vmatpush1.bf16.msra.mxu0 %v166
    %213 = vmatprep.subr.bf16.mxu0 0
    %214 = vmatpush1.bf16.msra.mxu0 %v167
    %215 = vmatprep.subr.bf16.mxu0 0
    %216 = vmatpush1.bf16.msra.mxu0 %v168
    %217 = vmatprep.mubr.bf16.mxu0 %v86
    %218 = vmatmul.mubr.bf16.gmra.mrb[0].mxu0 %v85
    %v219 = vpop.f32.mrb[0].mxu0
    %v220 = vadd.f32 %v80, %v219
    %v221 = vpop.f32.mrb[0].mxu0
    %v222 = vpop.f32.mrb[0].mxu0
    %v223 = vpop.f32.mrb[0].mxu0
    %224 = vdwg.mxu0
    %v225 = vmax.f32 %v220, 0.0
    %226 = vst [vmem:[#allocation7] sm:$0xff] %v225
    // Predicated region
    $region22: #{tpu_custom_call.1} parent=1 // pred_check
      _
    $region23: #{tpu_custom_call.1} parent=1 // pred_check_branch
      %228 = sbr.rel (0) target = $region25
    $region24: #{tpu_custom_call.1} parent=1 // pred_region
      %s230 = ssub.s32 128, 128
      %231 = vsyncadd [#allocation4], %s230
      %s233 = sshll.u32 [#allocation7], 4
      %s234 = int_to_ptr.vmem [resolvable:$true] %s233
      %236 = dma.vmem_to_hbm [thread:$0]  %s234, 128, %s3, [#allocation4]
    $region25: #{tpu_custom_call.1} parent=1 // pred_fallthru
      _
    // Predicated region
    $region26: #{tpu_custom_call.1} parent=1 // pred_check
      _
    $region27: #{tpu_custom_call.1} parent=1 // pred_check_branch
      %238 = sbr.rel (0) target = $region29
    $region28: #{tpu_custom_call.1} parent=1 // pred_region
      %239 = dma.done [#allocation4], 128
    $region29: #{tpu_custom_call.1} parent=1 // pred_fallthru
      _
    %240 = vsyncpa [#allocation3], 1
    %241 = vsyncpa [#allocation6], 1
    %242 = vsyncpa [#allocation4], 1

</llo_original>
